<compile_context>
chip_gen: v5e
topology: v5e:2x2
jax: 0.10.0
libtpu: 0.0.40
codegen_flags: <defaults>
</compile_context>

<pallas_src>
import jax
import jax.numpy as jnp
from jax.experimental import pallas as pl
from jax.experimental.pallas import tpu as pltpu

LANE = 128


def conv1x1_kernel(x_ref, w_ref, b_ref, o_ref):
    # x_ref: (C_in, TILE_HW) f32     w_ref: (C_out, C_in) f32 (VMEM-resident)
    # b_ref: (C_out, 1) f32          o_ref: (C_out, TILE_HW) f32
    acc = jnp.dot(w_ref[...], x_ref[...], preferred_element_type=jnp.float32)
    o_ref[...] = (acc + b_ref[...]).astype(o_ref.dtype)


def appearance_encoder_forward(x, params, *, tile_hw=4096):
    """x: (N, dim_x, H, W) float32 NCHW.  Returns (N, dim_a, H, W) float32."""
    n, c_in, h, w_sp = x.shape
    w = params["w"]                       # (C_out, C_in) == torch weight[:, :, 0, 0]
    b = params["b"]                       # (C_out, 1)    == torch bias[:, None]
    c_out = w.shape[0]

    hw = h * w_sp
    # Lane-axis tile: multiple of 128, no larger than the padded image.
    hw_min_pad = pl.cdiv(hw, LANE) * LANE
    tile_hw = max(LANE, min((tile_hw // LANE) * LANE, hw_min_pad))
    hw_pad = pl.cdiv(hw, tile_hw) * tile_hw

    # NCHW -> (N, C_in, H*W); contiguous reshape, no transpose.
    x3d = x.reshape(n, c_in, hw).astype(jnp.float32)
    if hw_pad != hw:
        x3d = jnp.pad(x3d, ((0, 0), (0, 0), (0, hw_pad - hw)))

    w_f32 = w.astype(jnp.float32)
    b_f32 = b.reshape(c_out, 1).astype(jnp.float32)

    grid = (n, hw_pad // tile_hw)

    flops = 2 * n * hw_pad * c_in * c_out
    bytes_accessed = 4 * (n * c_in * hw_pad + c_out * c_in + c_out
                          + n * c_out * hw_pad)

    y3d = pl.pallas_call(
        conv1x1_kernel,
        out_shape=jax.ShapeDtypeStruct((n, c_out, hw_pad), jnp.float32),
        grid_spec=pltpu.PrefetchScalarGridSpec(
            num_scalar_prefetch=0,
            grid=grid,
            in_specs=[
                # activations: tiled over (batch, pixel) axes; batch squeezed.
                pl.BlockSpec((None, c_in, tile_hw), lambda bi, ti: (bi, 0, ti)),
                # weight + bias: constant index_map -> resident in VMEM.
                pl.BlockSpec((c_out, c_in), lambda bi, ti: (0, 0)),
                pl.BlockSpec((c_out, 1), lambda bi, ti: (0, 0)),
            ],
            out_specs=pl.BlockSpec((None, c_out, tile_hw),
                                   lambda bi, ti: (bi, 0, ti)),
        ),
        compiler_params=pltpu.CompilerParams(
            dimension_semantics=("parallel", "parallel")),
        cost_estimate=pl.CostEstimate(flops=flops, transcendentals=0,
                                      bytes_accessed=bytes_accessed),
    )(x3d, w_f32, b_f32)

    y3d = y3d[:, :, :hw]                          # drop pixel padding
    return y3d.reshape(n, c_out, h, w_sp)         # (N, C_out, H, W), no transpose


def init_params(dim_x, dim_a, key):
    """Synthetic Conv2d(dim_x, dim_a, 1) parameters.

    Stored as (C_out, C_in) / (C_out, 1), i.e. the PyTorch conv weight
    (C_out, C_in, 1, 1) with the 1x1 spatial dims squeezed out.
    """
    kw, kb = jax.random.split(key)
    scale = 0.1
    return {
        "w": scale * jax.random.normal(kw, (dim_a, dim_x), jnp.float32),
        "b": scale * jax.random.normal(kb, (dim_a, 1), jnp.float32),
    }


def reference_forward(x, params):
    """Pure-JAX f32 reference of the same math (1x1 conv + identity)."""
    y = jnp.einsum("nchw,dc->ndhw", x, params["w"])
    return y + params["b"].reshape(1, -1, 1, 1)


if __name__ == "__main__":
    key = jax.random.PRNGKey(0)
    k_x, k_p = jax.random.split(key)

    batch, dim_x, spatial = 2, 4, 16     # args.dim_x = 4
    dim_a = 32                           # args.dim_enc_a = 32

    x = jax.random.normal(k_x, (batch, dim_x, spatial, spatial), jnp.float32)
    params = init_params(dim_x, dim_a, k_p)

    y = appearance_encoder_forward(x, params)
    y = jax.block_until_ready(y)

    y_ref = reference_forward(x, params)
    assert y.shape == (batch, dim_a, spatial, spatial)
    # f32 inputs / f32 accumulate -> tight parity with the f32 reference.
    assert jnp.allclose(y, y_ref, atol=1e-3, rtol=1e-3), (
        float(jnp.max(jnp.abs(y - y_ref))))

    print("KERNEL_OK")
</pallas_src>

<mosaic_0001>
module attributes {stable_mosaic.version = 11 : i64} {
  func.func @conv1x1_kernel(%arg0: i32, %arg1: i32, %arg2: memref<1x4x256xf32, #tpu.memory_space<vmem>>, %arg3: memref<32x4xf32, #tpu.memory_space<vmem>>, %arg4: memref<32x1xf32, #tpu.memory_space<vmem>>, %arg5: memref<1x32x256xf32, #tpu.memory_space<vmem>>) attributes {dimension_semantics = [#tpu.dimension_semantics<parallel>, #tpu.dimension_semantics<parallel>], iteration_bounds = array<i64: 2, 1>, scalar_prefetch = 0 : i64, scratch_operands = 0 : i64, tpu.core_type = #tpu.core_type<tc>, window_params = [{transform_indices = @transform_0, window_bounds = array<i64: 1, 4, 256>}, {pipeline_mode = #tpu.pipeline_mode<synchronous>, transform_indices = @transform_1, window_bounds = array<i64: 32, 4>}, {pipeline_mode = #tpu.pipeline_mode<synchronous>, transform_indices = @transform_2, window_bounds = array<i64: 32, 1>}, {transform_indices = @transform_3, window_bounds = array<i64: 1, 32, 256>}]} {
    %c0 = arith.constant 0 : index
    %c0_0 = arith.constant 0 : index
    %0 = vector.load %arg3[%c0, %c0_0] : memref<32x4xf32, #tpu.memory_space<vmem>>, vector<32x4xf32>
    %c0_1 = arith.constant 0 : index
    %c0_2 = arith.constant 0 : index
    %c0_3 = arith.constant 0 : index
    %1 = vector.load %arg2[%c0_1, %c0_2, %c0_3] : memref<1x4x256xf32, #tpu.memory_space<vmem>>, vector<1x4x256xf32>
    %2 = vector.shape_cast %1 : vector<1x4x256xf32> to vector<4x256xf32>
    %cst = arith.constant dense<0.000000e+00> : vector<32x256xf32>
    %3 = tpu.matmul %0, %2, %cst {dimension_numbers = #tpu.dot_dimension_numbers<[1], [0], [0], [1], [0, 0, 1, 1], [], []>} : vector<32x4xf32>, vector<4x256xf32>, vector<32x256xf32> -> vector<32x256xf32>
    %c0_4 = arith.constant 0 : index
    %c0_5 = arith.constant 0 : index
    %4 = vector.load %arg4[%c0_4, %c0_5] : memref<32x1xf32, #tpu.memory_space<vmem>>, vector<32x1xf32>
    %5 = vector.broadcast %4 : vector<32x1xf32> to vector<32x256xf32>
    %6 = arith.addf %3, %5 : vector<32x256xf32>
    %c0_6 = arith.constant 0 : index
    %c0_7 = arith.constant 0 : index
    %c0_8 = arith.constant 0 : index
    %7 = vector.load %arg5[%c0_6, %c0_7, %c0_8] : memref<1x32x256xf32, #tpu.memory_space<vmem>>, vector<1x32x256xf32>
    %8 = vector.shape_cast %7 : vector<1x32x256xf32> to vector<32x256xf32>
    %9 = vector.shape_cast %6 : vector<32x256xf32> to vector<1x32x256xf32>
    tpu.vector_store %arg5[%c0_6, %c0_7, %c0_8], %9 {strides = array<i32>} : memref<1x32x256xf32, #tpu.memory_space<vmem>>, vector<1x32x256xf32>,
    return
  }
  func.func @transform_0(%arg0: i32, %arg1: i32) -> (i32, i32, i32) {
    %c0_i32 = arith.constant 0 : i32
    %c0_i32_0 = arith.constant 0 : i32
    return %arg0, %c0_i32, %arg1 : i32, i32, i32
  }
  func.func @transform_1(%arg0: i32, %arg1: i32) -> (i32, i32) {
    %c0_i32 = arith.constant 0 : i32
    %c0_i32_0 = arith.constant 0 : i32
    %c0_i32_1 = arith.constant 0 : i32
    return %c0_i32, %c0_i32_0 : i32, i32
  }
  func.func @transform_2(%arg0: i32, %arg1: i32) -> (i32, i32) {
    %c0_i32 = arith.constant 0 : i32
    %c0_i32_0 = arith.constant 0 : i32
    %c0_i32_1 = arith.constant 0 : i32
    return %c0_i32, %c0_i32_0 : i32, i32
  }
  func.func @transform_3(%arg0: i32, %arg1: i32) -> (i32, i32, i32) {
    %c0_i32 = arith.constant 0 : i32
    %c0_i32_0 = arith.constant 0 : i32
    return %arg0, %c0_i32, %arg1 : i32, i32, i32
  }
}

</mosaic_0001>

<llo_original>
// kernel: tpu_custom_call.1
$region0: #{tpu_custom_call.1}
  #allocation0 [shape = 'u32[]', space=smem, size = 0x4, offset = 0x4, fixed_abs, tag = 'smem constant byte address 0x4 - core index']
  #allocation1 [shape = 'u32[72,128]{1,0:T(1,128)}', space=vmem, size = 0x9000, scoped, tag = 'internal scratch']
  %s0 = inlined_call_operand.vmem [shape: f32[2,4,256], index: 0, kind: input, shape index: {}]
  %s1 = inlined_call_operand.vmem [shape: f32[32,4], index: 1, kind: input, shape index: {}]
  %s2 = inlined_call_operand.vmem [shape: f32[32,1], index: 2, kind: input, shape index: {}]
  %s3 = inlined_call_operand.hbm [shape: f32[2,32,256], index: 3, kind: output, shape index: {}]
  %s4 = sld [smem:[#allocation0]]
  $region45: #{tpu_custom_call.1} parent=0
    _
  %s6 = ssub.s32 1, %s4
  %s7 = scalar_select 0, %s6, %s4
  $region1: #{tpu_custom_call.1} parent=0
    #allocation2 [shape = 'u8[65536]{0}', space=vmem, size = 0x10000, scoped, tag = 'output window, operand 0']
    #allocation3 [shape = 's32[2]{0}', space=sflag, size = 0x8, scoped, tag = 'scoped memory for tpu_custom_call.1']
    %8 = vsyncpa [#allocation3], 0
    %s9 = scalar_lea.sflag [#allocation3], 1
    %10 = vsyncpa %s9, 0
    loop: start=0, step=1, limit=4
    $region2: #{tpu_custom_call.1} parent=1 // loop_pre_header
      _
    $region3: #{tpu_custom_call.1} parent=1 // loop_header
      %s12 = sphi 0, %s16
      %p13 = scmp.ge.s32.totalorder %s12, 4
      %s19 = sphi 0, %s31
      %s20 = sphi 0, %s27
      %s21 = sphi 0, %s19
      %s22 = sphi 0, %s20
      %s23 = sphi 0, %s21
      %s24 = sphi 0, %s22
      %s36 = sphi 0, %s38
      %s39 = sphi 0, %s36
      %s40 = sphi 0, %s39
      %s56 = sphi 0, %s40
      %s60 = sphi 0, %s60
      %s62 = sphi 0, %s60
      %s63 = sphi 0, %s62
      %s77 = sphi 0, %s63
      %s81 = sphi 0, %s81
      %s83 = sphi 0, %s81
      %s84 = sphi 0, %s83
      %s98 = sphi 0, %s84
      %s106 = sphi 0, %s108
      %s109 = sphi 0, %s106
      %s110 = sphi 0, %s109
      %s126 = sphi 0, %s110
    $region4: #{tpu_custom_call.1} parent=1 // loop_header_branch
      %15 = sbr.rel (%p13) target = $region8
    $region5: #{tpu_custom_call.1} parent=1 // loop_body
      %s17 = ssub.s32 %s12, 1
      %s18 = ssub.s32 %s12, 2
      %s25 = sadd.s32 1, %s20
      %p26 = scmp.ge.s32.totalorder %s25, 1
      %s27 = scalar_select %p26, 0, %s25
      %s28 = sadd.s32 1, %s19
      %s29 = scalar_select %p26, %s28, %s19
      %p30 = scmp.ge.s32.totalorder %s29, 2
      %s31 = scalar_select %p30, 0, %s29
      %s32 = ssub.s32 %s19, %s31
      %s33 = ssub.s32 %s20, %s27
      %s34 = sor.u32 %s32, %s33
      %p35 = scmp.eq.s32.totalorder %s34, 0
      %s37 = sadd.s32 %s36, 1
      %s38 = scalar_select %p35, %s36, %s37
      %p41 = pneg %p35
      %p42 = scmp.eq.s32.totalorder %s12, 1
      %p43 = por %p41, %p42
      %p44 = scmp.ne.s32.totalorder %s36, %s39
      %p45 = scmp.eq.s32.totalorder %s12, 0
      %p46 = por %p44, %p45
      %p47 = scmp.ne.s32.totalorder %s36, %s39
      %p48 = scmp.eq.s32.totalorder %s17, 1
      %p49 = por %p47, %p48
      %p50 = scmp.ne.s32.totalorder %s39, %s40
      %p51 = scmp.eq.s32.totalorder %s17, 0
      %p52 = por %p50, %p51
      %p53 = scmp.ne.s32.totalorder %s39, %s40
      %p54 = scmp.eq.s32.totalorder %s18, 1
      %p55 = por %p53, %p54
      %p57 = scmp.ne.s32.totalorder %s40, %s56
      %p58 = scmp.eq.s32.totalorder %s18, 0
      %p59 = por %p57, %p58
      %s61 = sadd.s32 %s60, 1
      %p64 = scmp.eq.s32.totalorder %s12, 1
      %p65 = scmp.ne.s32.totalorder %s60, %s62
      %p66 = scmp.eq.s32.totalorder %s12, 0
      %p67 = por %p65, %p66
      %p68 = scmp.ne.s32.totalorder %s60, %s62
      %p69 = scmp.eq.s32.totalorder %s17, 1
      %p70 = por %p68, %p69
      %p71 = scmp.ne.s32.totalorder %s62, %s63
      %p72 = scmp.eq.s32.totalorder %s17, 0
      %p73 = por %p71, %p72
      %p74 = scmp.ne.s32.totalorder %s62, %s63
      %p75 = scmp.eq.s32.totalorder %s18, 1
      %p76 = por %p74, %p75
      %p78 = scmp.ne.s32.totalorder %s63, %s77
      %p79 = scmp.eq.s32.totalorder %s18, 0
      %p80 = por %p78, %p79
      %s82 = sadd.s32 %s81, 1
      %p85 = scmp.eq.s32.totalorder %s12, 1
      %p86 = scmp.ne.s32.totalorder %s81, %s83
      %p87 = scmp.eq.s32.totalorder %s12, 0
      %p88 = por %p86, %p87
      %p89 = scmp.ne.s32.totalorder %s81, %s83
      %p90 = scmp.eq.s32.totalorder %s17, 1
      %p91 = por %p89, %p90
      %p92 = scmp.ne.s32.totalorder %s83, %s84
      %p93 = scmp.eq.s32.totalorder %s17, 0
      %p94 = por %p92, %p93
      %p95 = scmp.ne.s32.totalorder %s83, %s84
      %p96 = scmp.eq.s32.totalorder %s18, 1
      %p97 = por %p95, %p96
      %p99 = scmp.ne.s32.totalorder %s84, %s98
      %p100 = scmp.eq.s32.totalorder %s18, 0
      %p101 = por %p99, %p100
      %s102 = ssub.s32 %s19, %s31
      %s103 = ssub.s32 %s20, %s27
      %s104 = sor.u32 %s102, %s103
      %p105 = scmp.eq.s32.totalorder %s104, 0
      %s107 = sadd.s32 %s106, 1
      %s108 = scalar_select %p105, %s106, %s107
      %p111 = pneg %p105
      %p112 = scmp.eq.s32.totalorder %s12, 1
      %p113 = por %p111, %p112
      %p114 = scmp.ne.s32.totalorder %s106, %s109
      %p115 = scmp.eq.s32.totalorder %s12, 0
      %p116 = por %p114, %p115
      %p117 = scmp.ne.s32.totalorder %s106, %s109
      %p118 = scmp.eq.s32.totalorder %s17, 1
      %p119 = por %p117, %p118
      %p120 = scmp.ne.s32.totalorder %s109, %s110
      %p121 = scmp.eq.s32.totalorder %s17, 0
      %p122 = por %p120, %p121
      %p123 = scmp.ne.s32.totalorder %s109, %s110
      %p124 = scmp.eq.s32.totalorder %s18, 1
      %p125 = por %p123, %p124
      %p127 = scmp.ne.s32.totalorder %s110, %s126
      %p128 = scmp.eq.s32.totalorder %s18, 0
      %p129 = por %p127, %p128
      %p130 = scmp.le.s32.totalorder 1, %s12
      %p131 = scmp.lt.s32.totalorder %s12, 3
      %p132 = pnand %p130, %p131
      %p133 = pneg %p132
      // Predicated region
      $region9: #{tpu_custom_call.1} parent=5 // pred_check
        _
      $region10: #{tpu_custom_call.1} parent=5 // pred_check_branch
        %135 = sbr.rel (%p132) target = $region12
      $region11: #{tpu_custom_call.1} parent=5 // pred_region
        %s136 = ssub.s32 %s12, 1
        // Predicated region
        $region13: #{tpu_custom_call.1} parent=11 // pred_check
          %p137 = pneg %p73
        $region14: #{tpu_custom_call.1} parent=11 // pred_check_branch
          %139 = sbr.rel (%p137) target = $region16
        $region15: #{tpu_custom_call.1} parent=11 // pred_region
          _
        $region16: #{tpu_custom_call.1} parent=11 // pred_fallthru
          _
        // Predicated region
        $region17: #{tpu_custom_call.1} parent=11 // pred_check
          %p140 = pneg %p94
        $region18: #{tpu_custom_call.1} parent=11 // pred_check_branch
          %142 = sbr.rel (%p140) target = $region20
        $region19: #{tpu_custom_call.1} parent=11 // pred_region
          _
        $region20: #{tpu_custom_call.1} parent=11 // pred_fallthru
          _
      $region12: #{tpu_custom_call.1} parent=5 // pred_fallthru
        _
      %p143 = scmp.lt.s32.totalorder %s12, 2
      // Predicated region
      $region21: #{tpu_custom_call.1} parent=5 // pred_check
        %p144 = pneg %p143
      $region22: #{tpu_custom_call.1} parent=5 // pred_check_branch
        %146 = sbr.rel (%p144) target = $region24
      $region23: #{tpu_custom_call.1} parent=5 // pred_region
        // Predicated region
        $region25: #{tpu_custom_call.1} parent=23 // pred_check
          %p147 = pneg %p46
        $region26: #{tpu_custom_call.1} parent=23 // pred_check_branch
          %149 = sbr.rel (%p147) target = $region28
        $region27: #{tpu_custom_call.1} parent=23 // pred_region
          %s150 = smul.u32 2, %s20
          %p151 = scmp.lt.s32.totalorder %s19, 1
          %s152 = scalar_select %p151, %s19, 1
          %p153 = scmp.lt.s32.totalorder %s150, 1
          %s154 = scalar_select %p153, %s150, 1
          %s155 = smul.addr %s152, 2
          %s156 = sadd.s32 %s154, %s155
          %s157 = smul.addr %s156, 4
          %s158 = scalar_lea.vmem %s0, %s157
          %s159 = smul.u32 2, %s20
        $region28: #{tpu_custom_call.1} parent=23 // pred_fallthru
          _
      $region24: #{tpu_custom_call.1} parent=5 // pred_fallthru
        _
      %p160 = scmp.le.s32.totalorder 1, %s12
      %p161 = scmp.lt.s32.totalorder %s12, 3
      %p162 = pnand %p160, %p161
      %p163 = pneg %p162
      // Predicated region
      $region29: #{tpu_custom_call.1} parent=5 // pred_check
        _
      $region30: #{tpu_custom_call.1} parent=5 // pred_check_branch
        %165 = sbr.rel (%p162) target = $region32
      $region31: #{tpu_custom_call.1} parent=5 // pred_region
        %s166 = ssub.s32 %s12, 1
        %s167 = smul.u32 2, %s22
        %p168 = scmp.lt.s32.totalorder %s21, 1
        %s169 = scalar_select %p168, %s21, 1
        %p170 = scmp.lt.s32.totalorder %s167, 1
        %s171 = scalar_select %p170, %s167, 1
        %s172 = smul.addr %s169, 2
        %s173 = sadd.s32 %s171, %s172
        %s174 = smul.addr %s173, 4
        %s175 = scalar_lea.vmem %s0, %s174
        %p176 = pneg %p52
        %p177 = pneg %p49
        %p178 = pneg %p73
        %p179 = pneg %p70
        %p180 = pneg %p94
        %p181 = pneg %p91
        %p182 = pneg %p122
        %p183 = pneg %p119
        %s184 = sand.u32 %s109, 1
        %s185 = scalar_lea.sflag [#allocation3], %s184
        %s186 = sand.u32 %s109, 1
        %s187 = smul.addr %s186, 64
        %s188 = scalar_lea.vmem [#allocation2], %s187
        %s189 = smul.u32 2, %s22
        %p190 = scmp.lt.s32.totalorder %s21, 1
        %s191 = scalar_select %p190, %s21, 1
        %p192 = scmp.lt.s32.totalorder %s189, 1
        %s193 = scalar_select %p192, %s189, 1
        %s194 = smul.addr %s191, 2
        %s195 = sadd.s32 %s193, %s194
        %s196 = smul.addr %s195, 4
        %s197 = scalar_lea.vmem %s0, %s196
        %s198 = smul.u32 2, %s22
        %s199 = smul.u32 2, %s22
        %v200 = vld [vmem:[%s1] sm:$0xff]
        %v201 = vld [vmem:[%s1 + $0x8] sm:$0xff]
        %v202 = vld [vmem:[%s1 + $0x10] sm:$0xff]
        %v203 = vld [vmem:[%s1 + $0x18] sm:$0xff]
        %v204 = vld [vmem:[%s197] sm:$0xff]
        %v205 = vld [vmem:[%s2] sm:$0xff]
        %v206 = vld [vmem:[%s2 + $0x8] sm:$0xff]
        %v207 = vld [vmem:[%s2 + $0x10] sm:$0xff]
        %v208 = vld [vmem:[%s2 + $0x18] sm:$0xff]
        %210 = vset.pattern.permute.xlu0 0
        %211 = vperm.xlu0 %210, %v205
        %v212 = vpop.permute.xlu0 %211
        %215 = vset.pattern.permute.xlu0 0
        %216 = vperm.xlu0 %215, %v206
        %v217 = vpop.permute.xlu0 %216
        %220 = vset.pattern.permute.xlu0 0
        %221 = vperm.xlu0 %220, %v207
        %v222 = vpop.permute.xlu0 %221
        %225 = vset.pattern.permute.xlu0 0
        %226 = vperm.xlu0 %225, %v208
        %v227 = vpop.permute.xlu0 %226
        %230 = vst [vmem:[#allocation1] ss:$2 sm:$0xff] %v204
        %v231 = vld.sshfl [vmem:[#allocation1] sm:$0xff pattern:$0x75316420]
        %v232 = vld.sshfl [vmem:[#allocation1 + $0x8] sm:$0xff pattern:$0x75316420]
        %vm233 = vcmask 31744
        %v235 = vsel %vm233, %v200, 0
        %v238 = vsel %vm233, %v201, 0
        %v241 = vsel %vm233, %v202, 0
        %v244 = vsel %vm233, %v203, 0
        %vm246 = vcmask 1043456
        %v247 = vsel %vm246, %v231, 0
        %v249 = vsel %vm246, %v232, 0
        %251 = vmatpush.msra.mxu0 0.0
        %252 = vmatpush.msra.mxu0 0.0
        %253 = vmatpush.msra.mxu0 0.0
        %254 = vmatpush.msra.mxu0 0.0
        %255 = vmatpush.msra.mxu0 0.0
        %256 = vmatpush.msra.mxu0 0.0
        %257 = vmatpush.msra.mxu0 0.0
        %258 = vmatpush.msra.mxu0 0.0
        %259 = vmatpush.msra.mxu0 0.0
        %260 = vmatpush.msra.mxu0 0.0
        %261 = vmatpush.msra.mxu0 0.0
        %262 = vmatpush.msra.mxu0 0.0
        %263 = vmatpush.msra.mxu0 0.0
        %264 = vmatpush.msra.mxu0 0.0
        %265 = vmatpush.msra.mxu0 0.0
        %266 = vmatpush.msra.mxu0 %v247
        %267 = vmatmul.f32.gmra.mxu0 %v235
        %v268 = vpop.f32.mrf.mxu0
        %v269 = vadd.f32 %v212, %v268
        %270 = vmatmul.f32.gmra.mxu0 %v238
        %v271 = vpop.f32.mrf.mxu0
        %v272 = vadd.f32 %v217, %v271
        %273 = vmatmul.f32.gmra.mxu0 %v241
        %v274 = vpop.f32.mrf.mxu0
        %v275 = vadd.f32 %v222, %v274
        %276 = vmatmul.f32.gmra.mxu0 %v244
        %v277 = vpop.f32.mrf.mxu0
        %v278 = vadd.f32 %v227, %v277
        %279 = vdwg.mxu0
        %280 = vmatpush.msra.mxu0 0.0
        %281 = vmatpush.msra.mxu0 0.0
        %282 = vmatpush.msra.mxu0 0.0
        %283 = vmatpush.msra.mxu0 0.0
        %284 = vmatpush.msra.mxu0 0.0
        %285 = vmatpush.msra.mxu0 0.0
        %286 = vmatpush.msra.mxu0 0.0
        %287 = vmatpush.msra.mxu0 0.0
        %288 = vmatpush.msra.mxu0 0.0
        %289 = vmatpush.msra.mxu0 0.0
        %290 = vmatpush.msra.mxu0 0.0
        %291 = vmatpush.msra.mxu0 0.0
        %292 = vmatpush.msra.mxu0 0.0
        %293 = vmatpush.msra.mxu0 0.0
        %294 = vmatpush.msra.mxu0 0.0
        %295 = vmatpush.msra.mxu0 %v249
        %296 = vmatmul.f32.gmra.mxu0 %v235
        %v297 = vpop.f32.mrf.mxu0
        %v298 = vadd.f32 %v212, %v297
        %299 = vmatmul.f32.gmra.mxu0 %v238
        %v300 = vpop.f32.mrf.mxu0
        %v301 = vadd.f32 %v217, %v300
        %302 = vmatmul.f32.gmra.mxu0 %v241
        %v303 = vpop.f32.mrf.mxu0
        %v304 = vadd.f32 %v222, %v303
        %305 = vmatmul.f32.gmra.mxu0 %v244
        %v306 = vpop.f32.mrf.mxu0
        %v307 = vadd.f32 %v227, %v306
        %308 = vdwg.mxu0
        %309 = vst [vmem:[%s188] sm:$0xff] %v269
        %310 = vst [vmem:[%s188 + $0x8] sm:$0xff] %v298
        %311 = vst [vmem:[%s188 + $0x10] sm:$0xff] %v272
        %312 = vst [vmem:[%s188 + $0x18] sm:$0xff] %v301
        %313 = vst [vmem:[%s188 + $0x20] sm:$0xff] %v275
        %314 = vst [vmem:[%s188 + $0x28] sm:$0xff] %v304
        %315 = vst [vmem:[%s188 + $0x30] sm:$0xff] %v278
        %316 = vst [vmem:[%s188 + $0x38] sm:$0xff] %v307
        %s317 = sand.u32 %s109, 1
        %s318 = scalar_lea.sflag [#allocation3], %s317
        %s319 = sand.u32 %s109, 1
        %s320 = smul.addr %s319, 64
        %s321 = scalar_lea.vmem [#allocation2], %s320
        // Predicated region
        $region33: #{tpu_custom_call.1} parent=31 // pred_check
          %p322 = pneg %p119
        $region34: #{tpu_custom_call.1} parent=31 // pred_check_branch
          %324 = sbr.rel (%p322) target = $region36
        $region35: #{tpu_custom_call.1} parent=31 // pred_region
          %s325 = smul.u32 2, %s22
          %327 = vsyncadd %s318, 0
          %s328 = smul.addr %s21, 8
          %s329 = sadd.s32 %s325, %s328
          %s330 = smul.addr %s329, 8
          %s331 = scalar_lea.hbm %s3, %s330
          %s332 = sshll.u32 %s321, 4
          %s333 = int_to_ptr.vmem [resolvable:$true] %s332
          %s334 = sshll.u32 %s331, 4
          %s335 = int_to_ptr.hbm [resolvable:$true] %s334
          %340 = dma.vmem_to_hbm [thread:$0]  %s333, 1024, %s335, %s318, 256, 256, 16
        $region36: #{tpu_custom_call.1} parent=31 // pred_fallthru
          _
      $region32: #{tpu_custom_call.1} parent=5 // pred_fallthru
        _
      %p341 = scmp.le.s32.totalorder 2, %s12
      // Predicated region
      $region37: #{tpu_custom_call.1} parent=5 // pred_check
        %p342 = pneg %p341
      $region38: #{tpu_custom_call.1} parent=5 // pred_check_branch
        %344 = sbr.rel (%p342) target = $region40
      $region39: #{tpu_custom_call.1} parent=5 // pred_region
        %s345 = ssub.s32 %s12, 2
        // Predicated region
        $region41: #{tpu_custom_call.1} parent=39 // pred_check
          %p346 = pneg %p125
        $region42: #{tpu_custom_call.1} parent=39 // pred_check_branch
          %348 = sbr.rel (%p346) target = $region44
        $region43: #{tpu_custom_call.1} parent=39 // pred_region
          %s349 = sand.u32 %s110, 1
          %s350 = scalar_lea.sflag [#allocation3], %s349
          %s351 = sand.u32 %s110, 1
          %s352 = smul.addr %s351, 64
          %s353 = scalar_lea.vmem [#allocation2], %s352
          %355 = dma.done %s350, 1024
        $region44: #{tpu_custom_call.1} parent=39 // pred_fallthru
          _
      $region40: #{tpu_custom_call.1} parent=5 // pred_fallthru
        _
    $region6: #{tpu_custom_call.1} parent=1 // loop_footer
      %s16 = sadd.s32 1, %s12
    $region7: #{tpu_custom_call.1} parent=1 // loop_footer_branch
      %11 = sbr.rel target = $region3
    $region8: #{tpu_custom_call.1} parent=1 // loop_exit
      _
    %356 = vsyncpa [#allocation3], 1
    %s357 = scalar_lea.sflag [#allocation3], 1
    %358 = vsyncpa %s357, 1

</llo_original>
